<compile_context>
chip_gen: v5e
topology: v5e:2x2
jax: 0.10.0
libtpu: 0.0.40
codegen_flags: <defaults>
</compile_context>

<pallas_src>
import functools

import jax
import jax.numpy as jnp
from jax.experimental import pallas as pl
from jax.experimental.pallas import tpu as pltpu


def _round_up(n: int, m: int) -> int:
    return ((n + m - 1) // m) * m


def mlp_kernel(x_ref, w1_ref, b1_ref, w2_ref, b2_ref, o_ref):
    # x_ref : (TILE_B, IN) f32      w1_ref: (IN, HP) bf16   b1_ref: (1, HP) f32
    # w2_ref: (HP, OP)   bf16       b2_ref: (1, OP)  f32    o_ref : (TILE_B, OP) f32
    x = x_ref[...].astype(jnp.bfloat16)          # VPU cast, MXU eats bf16
    # Layer 1: MXU matmul with f32 accumulation, bias + ReLU on VPU in f32.
    h = jnp.dot(x, w1_ref[...], preferred_element_type=jnp.float32)
    h = jnp.maximum(h + b1_ref[...], 0.0)
    # Layer 2: re-quantize activations to bf16 for the MXU, f32 accumulation.
    o = jnp.dot(h.astype(jnp.bfloat16), w2_ref[...],
                preferred_element_type=jnp.float32)
    o_ref[...] = (o + b2_ref[...]).astype(o_ref.dtype)


@functools.partial(jax.jit, static_argnames=("max_tile_b",))
def simple_nn_forward(x, w1, b1, w2, b2, *, max_tile_b=512):
    """Pallas equivalent of SimpleNN.forward.

    x : (B, input_size) f32
    w1: (input_size, hidden) f32, b1: (1, hidden) f32
    w2: (hidden, output_size) f32, b2: (1, output_size) f32
    returns (B, output_size) f32
    """
    B, in_size = x.shape
    hidden = w1.shape[1]
    out_size = w2.shape[1]

    # --- wrapper-side padding to lane-dense shapes (done once, outside kernel) ---
    hp = _round_up(hidden, 128)      # 50 -> 128
    op = _round_up(out_size, 128)    # 8  -> 128
    tile_b = min(max_tile_b, _round_up(B, 8))
    b_pad = _round_up(B, tile_b)

    w1p = jnp.pad(w1, ((0, 0), (0, hp - hidden))).astype(jnp.bfloat16)
    b1p = jnp.pad(b1, ((0, 0), (0, hp - hidden)))                          # f32
    w2p = jnp.pad(w2, ((0, hp - hidden), (0, op - out_size))).astype(jnp.bfloat16)
    b2p = jnp.pad(b2, ((0, 0), (0, op - out_size)))                        # f32
    xp = x if b_pad == B else jnp.pad(x, ((0, b_pad - B), (0, 0)))         # f32

    grid = (b_pad // tile_b,)

    # Advisory cost hint: helps XLA schedule this (overhead-dominated at small
    # B) call sensibly relative to surrounding ops.
    flops = 2 * B * (in_size * hidden + hidden * out_size)
    bytes_accessed = (x.size + w1.size + b1.size + w2.size + b2.size
                      + B * out_size) * 4
    cost = pl.CostEstimate(flops=flops, transcendentals=0,
                           bytes_accessed=bytes_accessed)

    out_padded = pl.pallas_call(
        mlp_kernel,
        out_shape=jax.ShapeDtypeStruct((b_pad, op), jnp.float32),
        grid=grid,
        in_specs=[
            # Batch-tiled activations (pipelined / double-buffered by Pallas).
            pl.BlockSpec((tile_b, in_size), lambda i: (i, 0)),
            # Weights / biases: same block every grid step -> VMEM-resident.
            pl.BlockSpec((in_size, hp), lambda i: (0, 0)),
            pl.BlockSpec((1, hp), lambda i: (0, 0)),
            pl.BlockSpec((hp, op), lambda i: (0, 0)),
            pl.BlockSpec((1, op), lambda i: (0, 0)),
        ],
        out_specs=pl.BlockSpec((tile_b, op), lambda i: (i, 0)),
        compiler_params=pltpu.CompilerParams(
            dimension_semantics=("parallel",),
        ),
        cost_estimate=cost,
    )(xp, w1p, b1p, w2p, b2p)

    # Slice off batch / output-lane padding.
    return out_padded[:B, :out_size]


if __name__ == "__main__":
    # Small, forward-consistent shapes: batch=8, input_size=32, hidden=50, output_size=8.
    batch, input_size, hidden, output_size = 8, 32, 50, 8

    key = jax.random.PRNGKey(0)
    kx, kw1, kb1, kw2, kb2 = jax.random.split(key, 5)

    x = jax.random.normal(kx, (batch, input_size), dtype=jnp.float32)

    # Deterministic parameter init (Kaiming-uniform-like scale, nn.Linear default).
    lim1 = 1.0 / jnp.sqrt(jnp.float32(input_size))
    w1 = jax.random.uniform(kw1, (input_size, hidden), jnp.float32, -lim1, lim1)
    b1 = jax.random.uniform(kb1, (1, hidden), jnp.float32, -lim1, lim1)

    lim2 = 1.0 / jnp.sqrt(jnp.float32(hidden))
    w2 = jax.random.uniform(kw2, (hidden, output_size), jnp.float32, -lim2, lim2)
    b2 = jax.random.uniform(kb2, (1, output_size), jnp.float32, -lim2, lim2)

    out = simple_nn_forward(x, w1, b1, w2, b2)
    jax.block_until_ready(out)

    # Pure-JAX f32 reference of the same math (kernel uses bf16 MXU operands
    # with f32 accumulation, so compare with a bf16-appropriate tolerance).
    ref = jnp.maximum(x @ w1 + b1, 0.0) @ w2 + b2
    assert out.shape == (batch, output_size)
    assert jnp.allclose(out, ref, atol=3e-2, rtol=3e-2), (
        f"max abs err {jnp.max(jnp.abs(out - ref))}")

    print("KERNEL_OK")
</pallas_src>

<mosaic_0001>
module attributes {stable_mosaic.version = 11 : i64} {
  func.func @mlp_kernel(%arg0: i32, %arg1: memref<8x32xf32, #tpu.memory_space<vmem>>, %arg2: memref<32x128xbf16, #tpu.memory_space<vmem>>, %arg3: memref<1x128xf32, #tpu.memory_space<vmem>>, %arg4: memref<128x128xbf16, #tpu.memory_space<vmem>>, %arg5: memref<1x128xf32, #tpu.memory_space<vmem>>, %arg6: memref<8x128xf32, #tpu.memory_space<vmem>>) attributes {dimension_semantics = [#tpu.dimension_semantics<parallel>], iteration_bounds = array<i64: 1>, scalar_prefetch = 0 : i64, scratch_operands = 0 : i64, tpu.core_type = #tpu.core_type<tc>, window_params = [{transform_indices = @transform_0, window_bounds = array<i64: 8, 32>}, {pipeline_mode = #tpu.pipeline_mode<synchronous>, transform_indices = @transform_1, window_bounds = array<i64: 32, 128>}, {pipeline_mode = #tpu.pipeline_mode<synchronous>, transform_indices = @transform_2, window_bounds = array<i64: 1, 128>}, {pipeline_mode = #tpu.pipeline_mode<synchronous>, transform_indices = @transform_3, window_bounds = array<i64: 128, 128>}, {pipeline_mode = #tpu.pipeline_mode<synchronous>, transform_indices = @transform_4, window_bounds = array<i64: 1, 128>}, {transform_indices = @transform_5, window_bounds = array<i64: 8, 128>}]} {
    %c0 = arith.constant 0 : index
    %c0_0 = arith.constant 0 : index
    %0 = vector.load %arg1[%c0, %c0_0] : memref<8x32xf32, #tpu.memory_space<vmem>>, vector<8x32xf32>
    %1 = arith.truncf %0 : vector<8x32xf32> to vector<8x32xbf16>
    %c0_1 = arith.constant 0 : index
    %c0_2 = arith.constant 0 : index
    %2 = vector.load %arg2[%c0_1, %c0_2] : memref<32x128xbf16, #tpu.memory_space<vmem>>, vector<32x128xbf16>
    %cst = arith.constant dense<0.000000e+00> : vector<8x128xf32>
    %3 = tpu.matmul %1, %2, %cst {dimension_numbers = #tpu.dot_dimension_numbers<[1], [0], [0], [1], [0, 0, 1, 1], [], []>} : vector<8x32xbf16>, vector<32x128xbf16>, vector<8x128xf32> -> vector<8x128xf32>
    %c0_3 = arith.constant 0 : index
    %c0_4 = arith.constant 0 : index
    %4 = vector.load %arg3[%c0_3, %c0_4] : memref<1x128xf32, #tpu.memory_space<vmem>>, vector<1x128xf32>
    %5 = vector.broadcast %4 : vector<1x128xf32> to vector<8x128xf32>
    %6 = arith.addf %3, %5 : vector<8x128xf32>
    %cst_5 = arith.constant 0.000000e+00 : f32
    %7 = vector.broadcast %cst_5 : f32 to vector<8x128xf32>
    %8 = arith.maximumf %6, %7 : vector<8x128xf32>
    %9 = arith.truncf %8 : vector<8x128xf32> to vector<8x128xbf16>
    %c0_6 = arith.constant 0 : index
    %c0_7 = arith.constant 0 : index
    %10 = vector.load %arg4[%c0_6, %c0_7] : memref<128x128xbf16, #tpu.memory_space<vmem>>, vector<128x128xbf16>
    %cst_8 = arith.constant dense<0.000000e+00> : vector<8x128xf32>
    %11 = tpu.matmul %9, %10, %cst_8 {dimension_numbers = #tpu.dot_dimension_numbers<[1], [0], [0], [1], [0, 0, 1, 1], [], []>} : vector<8x128xbf16>, vector<128x128xbf16>, vector<8x128xf32> -> vector<8x128xf32>
    %c0_9 = arith.constant 0 : index
    %c0_10 = arith.constant 0 : index
    %12 = vector.load %arg5[%c0_9, %c0_10] : memref<1x128xf32, #tpu.memory_space<vmem>>, vector<1x128xf32>
    %13 = vector.broadcast %12 : vector<1x128xf32> to vector<8x128xf32>
    %14 = arith.addf %11, %13 : vector<8x128xf32>
    %c0_11 = arith.constant 0 : index
    %c0_12 = arith.constant 0 : index
    %15 = vector.load %arg6[%c0_11, %c0_12] : memref<8x128xf32, #tpu.memory_space<vmem>>, vector<8x128xf32>
    tpu.vector_store %arg6[%c0_11, %c0_12], %14 {strides = array<i32>} : memref<8x128xf32, #tpu.memory_space<vmem>>, vector<8x128xf32>,
    return
  }
  func.func @transform_0(%arg0: i32) -> (i32, i32) {
    %c0_i32 = arith.constant 0 : i32
    %c0_i32_0 = arith.constant 0 : i32
    return %arg0, %c0_i32 : i32, i32
  }
  func.func @transform_1(%arg0: i32) -> (i32, i32) {
    %c0_i32 = arith.constant 0 : i32
    %c0_i32_0 = arith.constant 0 : i32
    %c0_i32_1 = arith.constant 0 : i32
    return %c0_i32, %c0_i32_0 : i32, i32
  }
  func.func @transform_2(%arg0: i32) -> (i32, i32) {
    %c0_i32 = arith.constant 0 : i32
    %c0_i32_0 = arith.constant 0 : i32
    %c0_i32_1 = arith.constant 0 : i32
    return %c0_i32, %c0_i32_0 : i32, i32
  }
  func.func @transform_3(%arg0: i32) -> (i32, i32) {
    %c0_i32 = arith.constant 0 : i32
    %c0_i32_0 = arith.constant 0 : i32
    %c0_i32_1 = arith.constant 0 : i32
    return %c0_i32, %c0_i32_0 : i32, i32
  }
  func.func @transform_4(%arg0: i32) -> (i32, i32) {
    %c0_i32 = arith.constant 0 : i32
    %c0_i32_0 = arith.constant 0 : i32
    %c0_i32_1 = arith.constant 0 : i32
    return %c0_i32, %c0_i32_0 : i32, i32
  }
  func.func @transform_5(%arg0: i32) -> (i32, i32) {
    %c0_i32 = arith.constant 0 : i32
    %c0_i32_0 = arith.constant 0 : i32
    return %arg0, %c0_i32 : i32, i32
  }
}

</mosaic_0001>

<llo_original>
// kernel: simple_nn_forward.1
$region0: #{simple_nn_forward.1}
  #allocation0 [shape = 'u32[]', space=smem, size = 0x4, offset = 0x4, fixed_abs, tag = 'smem constant byte address 0x4 - core index']
  #allocation1 [shape = 'u32[72,128]{1,0:T(1,128)}', space=vmem, size = 0x9000, scoped, tag = 'internal scratch']
  %s0 = inlined_call_operand.vmem [shape: f32[8,32], index: 0, kind: input, shape index: {}]
  %s1 = inlined_call_operand.vmem [shape: bf16[32,128], index: 1, kind: input, shape index: {}]
  %s2 = inlined_call_operand.vmem [shape: f32[1,128], index: 2, kind: input, shape index: {}]
  %s3 = inlined_call_operand.vmem [shape: bf16[128,128], index: 3, kind: input, shape index: {}]
  %s4 = inlined_call_operand.vmem [shape: f32[1,128], index: 4, kind: input, shape index: {}]
  %s5 = inlined_call_operand.hbm [shape: f32[8,128], index: 5, kind: output, shape index: {}]
  %s6 = sld [smem:[#allocation0]]
  $region30: #{simple_nn_forward.1} parent=0
    _
  %s8 = ssub.s32 1, %s6
  %s9 = scalar_select 0, %s8, %s6
  $region1: #{simple_nn_forward.1} parent=0
    #allocation2 [shape = 'u8[4096]{0}', space=vmem, size = 0x1000, scoped, tag = 'output window, operand 0, single buffered']
    #allocation3 [shape = 's32[1]{0}', space=sflag, size = 0x4, scoped, tag = 'scoped memory for simple_nn_forward.1']
    %10 = vsyncpa [#allocation3], 0
    // Predicated region
    $region2: #{simple_nn_forward.1} parent=1 // pred_check
      _
    $region3: #{simple_nn_forward.1} parent=1 // pred_check_branch
      %12 = sbr.rel (0) target = $region5
    $region4: #{simple_nn_forward.1} parent=1 // pred_region
      _
    $region5: #{simple_nn_forward.1} parent=1 // pred_fallthru
      _
    // Predicated region
    $region6: #{simple_nn_forward.1} parent=1 // pred_check
      _
    $region7: #{simple_nn_forward.1} parent=1 // pred_check_branch
      %14 = sbr.rel (0) target = $region9
    $region8: #{simple_nn_forward.1} parent=1 // pred_region
      _
    $region9: #{simple_nn_forward.1} parent=1 // pred_fallthru
      _
    // Predicated region
    $region10: #{simple_nn_forward.1} parent=1 // pred_check
      _
    $region11: #{simple_nn_forward.1} parent=1 // pred_check_branch
      %16 = sbr.rel (0) target = $region13
    $region12: #{simple_nn_forward.1} parent=1 // pred_region
      _
    $region13: #{simple_nn_forward.1} parent=1 // pred_fallthru
      _
    // Predicated region
    $region14: #{simple_nn_forward.1} parent=1 // pred_check
      _
    $region15: #{simple_nn_forward.1} parent=1 // pred_check_branch
      %18 = sbr.rel (0) target = $region17
    $region16: #{simple_nn_forward.1} parent=1 // pred_region
      _
    $region17: #{simple_nn_forward.1} parent=1 // pred_fallthru
      _
    // Predicated region
    $region18: #{simple_nn_forward.1} parent=1 // pred_check
      _
    $region19: #{simple_nn_forward.1} parent=1 // pred_check_branch
      %20 = sbr.rel (0) target = $region21
    $region20: #{simple_nn_forward.1} parent=1 // pred_region
      _
    $region21: #{simple_nn_forward.1} parent=1 // pred_fallthru
      _
    %v22 = vld [vmem:[%s0] sm:$0xff]
    %v23 = vpack.c.bf16 %v22, %v22
    %v24 = vld [vmem:[%s1] sm:$0xf]
    %v25 = vld [vmem:[%s1 + $0x4] sm:$0xf]
    %v26 = vld [vmem:[%s1 + $0x8] sm:$0xf]
    %v27 = vld [vmem:[%s1 + $0xc] sm:$0xf]
    %v28 = vld [vmem:[%s2] sm:$0x1]
    %v30 = vperm.slane %v28, 0
    %v36 = vunpack.c.l.b16 %v24
    %v37 = vunpack.c.l.b16 %v25
    %v38 = vunpack.c.l.b16 %v26
    %v39 = vunpack.c.l.b16 %v27
    %v40 = vpack.c.b16 %v37, %v36
    %v41 = vpack.c.b16 %v39, %v38
    %vm44 = vcmask 261120
    %v46 = vsel %vm44, %v23, 0
    %48 = vmatpush.bf16.msra.mxu0 0
    %49 = vmatpush.bf16.msra.mxu0 0
    %50 = vmatpush.bf16.msra.mxu0 0
    %51 = vmatpush.bf16.msra.mxu0 0
    %52 = vmatpush.bf16.msra.mxu0 0
    %53 = vmatpush.bf16.msra.mxu0 0
    %54 = vmatpush.bf16.msra.mxu0 %v41
    %55 = vmatpush.bf16.msra.mxu0 %v40
    %56 = vmatmul.bf16.gmra.mxu0 %v46
    %v57 = vpop.f32.mrf.mxu0
    %v58 = vadd.f32 %v30, %v57
    %v59 = vpop.f32.mrf.mxu0
    %60 = vdwg.mxu0
    %v61 = vmax.f32 %v58, 0.0
    %v62 = vpack.c.bf16 %v61, %v61
    %v63 = vld [vmem:[%s3] sm:$0xf]
    %v64 = vld [vmem:[%s3 + $0x4] sm:$0xf]
    %v65 = vld [vmem:[%s3 + $0x8] sm:$0xf]
    %v66 = vld [vmem:[%s3 + $0xc] sm:$0xf]
    %v67 = vld [vmem:[%s3 + $0x10] sm:$0xf]
    %v68 = vld [vmem:[%s3 + $0x14] sm:$0xf]
    %v69 = vld [vmem:[%s3 + $0x18] sm:$0xf]
    %v70 = vld [vmem:[%s3 + $0x1c] sm:$0xf]
    %v71 = vld [vmem:[%s3 + $0x20] sm:$0xf]
    %v72 = vld [vmem:[%s3 + $0x24] sm:$0xf]
    %v73 = vld [vmem:[%s3 + $0x28] sm:$0xf]
    %v74 = vld [vmem:[%s3 + $0x2c] sm:$0xf]
    %v75 = vld [vmem:[%s3 + $0x30] sm:$0xf]
    %v76 = vld [vmem:[%s3 + $0x34] sm:$0xf]
    %v77 = vld [vmem:[%s3 + $0x38] sm:$0xf]
    %v78 = vld [vmem:[%s3 + $0x3c] sm:$0xf]
    %v79 = vld [vmem:[%s4] sm:$0x1]
    %v81 = vperm.slane %v79, 0
    %v99 = vunpack.c.l.b16 %v63
    %v100 = vunpack.c.l.b16 %v64
    %v101 = vunpack.c.l.b16 %v65
    %v102 = vunpack.c.l.b16 %v66
    %v103 = vunpack.c.l.b16 %v67
    %v104 = vunpack.c.l.b16 %v68
    %v105 = vunpack.c.l.b16 %v69
    %v106 = vunpack.c.l.b16 %v70
    %v107 = vunpack.c.l.b16 %v71
    %v108 = vunpack.c.l.b16 %v72
    %v109 = vunpack.c.l.b16 %v73
    %v110 = vunpack.c.l.b16 %v74
    %v111 = vunpack.c.l.b16 %v75
    %v112 = vunpack.c.l.b16 %v76
    %v113 = vunpack.c.l.b16 %v77
    %v114 = vunpack.c.l.b16 %v78
    %v115 = vpack.c.b16 %v100, %v99
    %v116 = vpack.c.b16 %v102, %v101
    %v117 = vpack.c.b16 %v104, %v103
    %v118 = vpack.c.b16 %v106, %v105
    %v119 = vpack.c.b16 %v108, %v107
    %v120 = vpack.c.b16 %v110, %v109
    %v121 = vpack.c.b16 %v112, %v111
    %v122 = vpack.c.b16 %v114, %v113
    %131 = vmatpush.bf16.msra.mxu0 %v122
    %132 = vmatpush.bf16.msra.mxu0 %v121
    %133 = vmatpush.bf16.msra.mxu0 %v120
    %134 = vmatpush.bf16.msra.mxu0 %v119
    %135 = vmatpush.bf16.msra.mxu0 %v118
    %136 = vmatpush.bf16.msra.mxu0 %v117
    %137 = vmatpush.bf16.msra.mxu0 %v116
    %138 = vmatpush.bf16.msra.mxu0 %v115
    %139 = vmatmul.bf16.gmra.mxu0 %v62
    %v140 = vpop.f32.mrf.mxu0
    %v141 = vadd.f32 %v81, %v140
    %v142 = vpop.f32.mrf.mxu0
    %143 = vdwg.mxu0
    %144 = vst [vmem:[#allocation2] sm:$0xff] %v141
    // Predicated region
    $region22: #{simple_nn_forward.1} parent=1 // pred_check
      _
    $region23: #{simple_nn_forward.1} parent=1 // pred_check_branch
      %146 = sbr.rel (0) target = $region25
    $region24: #{simple_nn_forward.1} parent=1 // pred_region
      %148 = vsyncadd [#allocation3], 0
      %s150 = sshll.u32 [#allocation2], 4
      %s151 = int_to_ptr.vmem [resolvable:$true] %s150
      %s152 = sshll.u32 %s5, 4
      %s153 = int_to_ptr.hbm [resolvable:$true] %s152
      %155 = dma.vmem_to_hbm [thread:$0]  %s151, 128, %s153, [#allocation3]
    $region25: #{simple_nn_forward.1} parent=1 // pred_fallthru
      _
    // Predicated region
    $region26: #{simple_nn_forward.1} parent=1 // pred_check
      _
    $region27: #{simple_nn_forward.1} parent=1 // pred_check_branch
      %157 = sbr.rel (0) target = $region29
    $region28: #{simple_nn_forward.1} parent=1 // pred_region
      %159 = dma.done [#allocation3], 128
    $region29: #{simple_nn_forward.1} parent=1 // pred_fallthru
      _
    %160 = vsyncpa [#allocation3], 1

</llo_original>
